<compile_context>
chip_gen: v7x
topology: tpu7x:2x2x1
jax: 0.10.0
libtpu: 0.0.40
codegen_flags: <defaults>
</compile_context>

<pallas_src>
import functools

import jax
import jax.numpy as jnp
from jax.experimental import pallas as pl
from jax.experimental.pallas import tpu as pltpu

_LANE = 128
_SUBLANE = 8
_MAX_BLOCK_ROWS = 8192  # (8192, 128) f32 = 4 MiB per input tile


def _num_parts_for_chip() -> int:
    """2-way megacore split only on v7x (2 TensorCores/chip); 1 otherwise."""
    try:
        kind = jax.devices()[0].device_kind.lower()
    except Exception:
        return 1
    return 2 if "v7" in kind else 1


def _neg_bce_sum_jax(x, y):
    """sum(y*log(x) + (1-y)*log(1-x)) with PyTorch's -100 clamp (negative BCE sum)."""
    x = x.astype(jnp.float32)
    y = y.astype(jnp.float32)
    log_x = jnp.maximum(jnp.log(x), jnp.float32(-100.0))
    log_1mx = jnp.maximum(jnp.log(1.0 - x), jnp.float32(-100.0))
    return jnp.sum(log_1mx + y * (log_x - log_1mx))


def _bce_partial_kernel(x_ref, y_ref, o_ref, *, rows, block_rows,
                        steps_per_part, ragged):
    """Accumulates (8,128) partial sums of y*log(x)+(1-y)*log(1-x)."""
    i = pl.program_id(1)

    @pl.when(i == 0)
    def _():
        o_ref[...] = jnp.zeros_like(o_ref)

    def accumulate(x, y):
        x = x.astype(jnp.float32)
        y = y.astype(jnp.float32)
        # PyTorch nn.BCELoss clamps each log term at -100.
        log_x = jnp.maximum(jnp.log(x), jnp.float32(-100.0))
        log_1mx = jnp.maximum(jnp.log(1.0 - x), jnp.float32(-100.0))
        # y*log(x) + (1-y)*log(1-x) == log_1mx + y*(log_x - log_1mx)  (fewer VALU ops)
        s = log_1mx + y * (log_x - log_1mx)
        # Pure VPU vreg adds; no per-step cross-lane reduction or scalar RMW.
        o_ref[...] += s.reshape(-1, _SUBLANE, _LANE).sum(axis=0)

    if ragged:
        p = pl.program_id(0)
        row0 = (p * steps_per_part + i) * block_rows
        needs_mask = row0 + block_rows > rows

        @pl.when(needs_mask)
        def _():
            # Mask BEFORE the logs: x = y = 1 contributes exactly zero
            # (log_x = 0, and the clamped log(1-x) term cancels with y = 1),
            # so unspecified VMEM bytes in edge/clamped blocks never leak.
            row_ids = row0 + jax.lax.broadcasted_iota(
                jnp.int32, (block_rows, _LANE), 0)
            valid = row_ids < rows
            x = jnp.where(valid, x_ref[...].astype(jnp.float32), jnp.float32(1.0))
            y = jnp.where(valid, y_ref[...].astype(jnp.float32), jnp.float32(1.0))
            accumulate(x, y)

        @pl.when(jnp.logical_not(needs_mask))
        def _():
            accumulate(x_ref[...], y_ref[...])
    else:
        accumulate(x_ref[...], y_ref[...])


@jax.jit
def adversarial_loss(inputs, labels, weight):
    """weight * mean BCE(inputs, labels), computed with a Pallas TPU kernel."""
    n = inputs.size
    x = inputs.reshape(-1)
    y = labels.reshape(-1)

    main_n = (n // _LANE) * _LANE
    rows = main_n // _LANE

    if rows < _SUBLANE:
        # Too small for a kernel launch to be worthwhile; do it in plain JAX.
        total = _neg_bce_sum_jax(x, y)
        return (weight * (-total / n)).astype(jnp.float32)

    # Kernel handles the 128-aligned prefix; the < 128-element tail (if any)
    # is folded in with plain JAX instead of a full-array padding copy.
    tail_total = jnp.float32(0.0)
    if main_n != n:
        tail_total = _neg_bce_sum_jax(x[main_n:], y[main_n:])
        x = x[:main_n]
        y = y[:main_n]

    x2 = x.reshape(rows, _LANE)   # free bitcast when n % 128 == 0
    y2 = y.reshape(rows, _LANE)

    block_rows = min(_MAX_BLOCK_ROWS, (rows // _SUBLANE) * _SUBLANE)
    num_row_blocks = -(-rows // block_rows)
    num_parts = min(_num_parts_for_chip(), num_row_blocks)
    steps_per_part = -(-num_row_blocks // num_parts)
    total_steps = num_parts * steps_per_part
    ragged = (rows % block_rows != 0) or (total_steps != num_row_blocks)

    if total_steps != num_row_blocks:
        # Clamp over-hanging steps onto the last real block; their contribution
        # is zeroed by the (gated) in-kernel row-index mask.
        def row_block_index(p, i):
            return jnp.minimum(p * steps_per_part + i, num_row_blocks - 1)
    else:
        def row_block_index(p, i):
            return p * steps_per_part + i

    in_spec_x = pl.BlockSpec((block_rows, _LANE),
                             lambda p, i: (row_block_index(p, i), 0))
    in_spec_y = pl.BlockSpec((block_rows, _LANE),
                             lambda p, i: (row_block_index(p, i), 0))
    out_spec = pl.BlockSpec((None, _SUBLANE, _LANE), lambda p, i: (p, 0, 0))

    kernel = functools.partial(
        _bce_partial_kernel, rows=rows, block_rows=block_rows,
        steps_per_part=steps_per_part, ragged=ragged)

    elems = rows * _LANE
    cost = pl.CostEstimate(
        flops=6 * elems,
        transcendentals=2 * elems,
        bytes_accessed=(x2.size * x2.dtype.itemsize
                        + y2.size * y2.dtype.itemsize
                        + num_parts * _SUBLANE * _LANE * 4),
    )

    partials = pl.pallas_call(
        kernel,
        out_shape=jax.ShapeDtypeStruct((num_parts, _SUBLANE, _LANE),
                                       jnp.float32),
        grid_spec=pltpu.PrefetchScalarGridSpec(
            num_scalar_prefetch=0,
            grid=(num_parts, steps_per_part),
            in_specs=[in_spec_x, in_spec_y],
            out_specs=out_spec,
        ),
        compiler_params=pltpu.CompilerParams(
            dimension_semantics=("parallel", "arbitrary"),
            vmem_limit_bytes=32 << 20),
        cost_estimate=cost,
    )(x2, y2)

    # Single tiny cross-lane reduce, negate, mean and weight scale in JAX.
    total = jnp.sum(partials) + tail_total
    return (weight * (-total / n)).astype(jnp.float32)


class AdversarialLoss:
    """Mirror of the PyTorch module: loss = weight * BCELoss()(inputs, labels)."""

    def __init__(self, weight):
        self.weight = weight
        self.loss = None

    def __call__(self, inputs, labels):
        self.loss = adversarial_loss(inputs, labels, self.weight)
        return self.loss


if __name__ == "__main__":
    key = jax.random.PRNGKey(0)
    k_in, k_lab = jax.random.split(key)

    # Discriminator-style outputs: probabilities in (0, 1), binary labels.
    shape = (2, 4, 16, 16)
    inputs = jax.nn.sigmoid(jax.random.normal(k_in, shape, dtype=jnp.float32))
    labels = (jax.random.uniform(k_lab, shape) > 0.5).astype(jnp.float32)
    weight = 0.5

    criterion = AdversarialLoss(weight)
    loss = criterion(inputs, labels)
    loss = jax.block_until_ready(loss)

    # Pure-JAX reference check (same clamping semantics as nn.BCELoss).
    log_x = jnp.maximum(jnp.log(inputs), -100.0)
    log_1mx = jnp.maximum(jnp.log(1.0 - inputs), -100.0)
    ref = weight * jnp.mean(-(labels * log_x + (1.0 - labels) * log_1mx))
    assert jnp.allclose(loss, ref, rtol=1e-5, atol=1e-6), (loss, ref)

    print("KERNEL_OK")
</pallas_src>

<mosaic_0001>
module attributes {stable_mosaic.version = 11 : i64} {
  func.func @_bce_partial_kernel(%arg0: i32, %arg1: i32, %arg2: memref<16x128xf32, #tpu.memory_space<vmem>>, %arg3: memref<16x128xf32, #tpu.memory_space<vmem>>, %arg4: memref<1x8x128xf32, #tpu.memory_space<vmem>>) attributes {dimension_semantics = [#tpu.dimension_semantics<parallel>, #tpu.dimension_semantics<arbitrary>], iteration_bounds = array<i64: 1, 1>, scalar_prefetch = 0 : i64, scratch_operands = 0 : i64, tpu.core_type = #tpu.core_type<tc>, window_params = [{transform_indices = @transform_0, window_bounds = array<i64: 16, 128>}, {transform_indices = @transform_1, window_bounds = array<i64: 16, 128>}, {transform_indices = @transform_2, window_bounds = array<i64: 1, 8, 128>}]} {
    %c0_i32 = arith.constant 0 : i32
    %0 = arith.cmpi eq, %arg1, %c0_i32 : i32
    %1 = arith.extui %0 : i1 to i32
    %c0_i32_0 = arith.constant 0 : i32
    %2 = arith.cmpi ne, %1, %c0_i32_0 : i32
    scf.if %2 {
      %cst_13 = arith.constant 0.000000e+00 : f32
      %24 = vector.broadcast %cst_13 : f32 to vector<8x128xf32>
      %c0_14 = arith.constant 0 : index
      %c0_15 = arith.constant 0 : index
      %c0_16 = arith.constant 0 : index
      %25 = vector.load %arg4[%c0_14, %c0_15, %c0_16] : memref<1x8x128xf32, #tpu.memory_space<vmem>>, vector<1x8x128xf32>
      %26 = vector.shape_cast %25 : vector<1x8x128xf32> to vector<8x128xf32>
      %27 = vector.shape_cast %24 : vector<8x128xf32> to vector<1x8x128xf32>
      tpu.vector_store %arg4[%c0_14, %c0_15, %c0_16], %27 {strides = array<i32>} : memref<1x8x128xf32, #tpu.memory_space<vmem>>, vector<1x8x128xf32>,
    } else {
    }
    %c0 = arith.constant 0 : index
    %c0_1 = arith.constant 0 : index
    %3 = vector.load %arg2[%c0, %c0_1] : memref<16x128xf32, #tpu.memory_space<vmem>>, vector<16x128xf32>
    %c0_2 = arith.constant 0 : index
    %c0_3 = arith.constant 0 : index
    %4 = vector.load %arg3[%c0_2, %c0_3] : memref<16x128xf32, #tpu.memory_space<vmem>>, vector<16x128xf32>
    %5 = math.log %3 : vector<16x128xf32>
    %cst = arith.constant -1.000000e+02 : f32
    %6 = vector.broadcast %cst : f32 to vector<16x128xf32>
    %7 = arith.maximumf %5, %6 : vector<16x128xf32>
    %cst_4 = arith.constant 1.000000e+00 : f32
    %8 = vector.broadcast %cst_4 : f32 to vector<16x128xf32>
    %9 = arith.subf %8, %3 : vector<16x128xf32>
    %10 = math.log %9 : vector<16x128xf32>
    %cst_5 = arith.constant -1.000000e+02 : f32
    %11 = vector.broadcast %cst_5 : f32 to vector<16x128xf32>
    %12 = arith.maximumf %10, %11 : vector<16x128xf32>
    %13 = arith.subf %7, %12 : vector<16x128xf32>
    %14 = arith.mulf %4, %13 : vector<16x128xf32>
    %15 = arith.addf %12, %14 : vector<16x128xf32>
    %c0_6 = arith.constant 0 : index
    %c0_7 = arith.constant 0 : index
    %c0_8 = arith.constant 0 : index
    %16 = vector.load %arg4[%c0_6, %c0_7, %c0_8] : memref<1x8x128xf32, #tpu.memory_space<vmem>>, vector<1x8x128xf32>
    %17 = vector.shape_cast %16 : vector<1x8x128xf32> to vector<8x128xf32>
    %18 = vector.shape_cast %15 : vector<16x128xf32> to vector<2x8x128xf32>
    %cst_9 = arith.constant dense<0.000000e+00> : vector<8x128xf32>
    %19 = vector.multi_reduction <add>, %18, %cst_9 [0] : vector<2x8x128xf32> to vector<8x128xf32>
    %20 = arith.addf %17, %19 : vector<8x128xf32>
    %c0_10 = arith.constant 0 : index
    %c0_11 = arith.constant 0 : index
    %c0_12 = arith.constant 0 : index
    %21 = vector.load %arg4[%c0_10, %c0_11, %c0_12] : memref<1x8x128xf32, #tpu.memory_space<vmem>>, vector<1x8x128xf32>
    %22 = vector.shape_cast %21 : vector<1x8x128xf32> to vector<8x128xf32>
    %23 = vector.shape_cast %20 : vector<8x128xf32> to vector<1x8x128xf32>
    tpu.vector_store %arg4[%c0_10, %c0_11, %c0_12], %23 {strides = array<i32>} : memref<1x8x128xf32, #tpu.memory_space<vmem>>, vector<1x8x128xf32>,
    return
  }
  func.func @transform_0(%arg0: i32, %arg1: i32) -> (i32, i32) {
    %c1_i32 = arith.constant 1 : i32
    %0 = arith.muli %arg0, %c1_i32 : i32
    %1 = arith.addi %0, %arg1 : i32
    %c0_i32 = arith.constant 0 : i32
    %c0_i32_0 = arith.constant 0 : i32
    return %1, %c0_i32 : i32, i32
  }
  func.func @transform_1(%arg0: i32, %arg1: i32) -> (i32, i32) {
    %c1_i32 = arith.constant 1 : i32
    %0 = arith.muli %arg0, %c1_i32 : i32
    %1 = arith.addi %0, %arg1 : i32
    %c0_i32 = arith.constant 0 : i32
    %c0_i32_0 = arith.constant 0 : i32
    return %1, %c0_i32 : i32, i32
  }
  func.func @transform_2(%arg0: i32, %arg1: i32) -> (i32, i32, i32) {
    %c0_i32 = arith.constant 0 : i32
    %c0_i32_0 = arith.constant 0 : i32
    %c0_i32_1 = arith.constant 0 : i32
    return %arg0, %c0_i32, %c0_i32_0 : i32, i32, i32
  }
}

</mosaic_0001>

<llo_original>
// kernel: adversarial_loss.1
$region0: #{adversarial_loss.1}
  #allocation0 [shape = 'u32[]', space=smem, size = 0x4, offset = 0x4, fixed_abs, tag = 'smem constant byte address 0x4 - core index']
  #allocation1 [shape = 'u32[144,128]{1,0:T(1,128)}', space=vmem, size = 0x12000, scoped, tag = 'internal scratch']
  %s0 = inlined_call_operand.vmem [shape: f32[16,128], index: 0, kind: input, shape index: {}]
  %s1 = inlined_call_operand.vmem [shape: f32[16,128], index: 1, kind: input, shape index: {}]
  %s2 = inlined_call_operand.vmem [shape: f32[1,8,128], index: 2, kind: output, shape index: {}]
  %s3 = sld [smem:[#allocation0]]
  $region22: #{adversarial_loss.1} parent=0
    _
  %s5 = ssub.s32 1, %s3
  %s6 = scalar_select 0, %s5, %s3
  // Predicated region
  $region2: #{adversarial_loss.1} parent=0 // pred_check
    _
  $region3: #{adversarial_loss.1} parent=0 // pred_check_branch
    %8 = sbr.rel (0) target = $region5
  $region4: #{adversarial_loss.1} parent=0 // pred_region
    %s9 = sadd.s32 0, 0
    %s10 = smul.u32 2, %s9
    %p11 = scmp.lt.s32.totalorder %s10, 1
    %s12 = scalar_select %p11, %s10, 1
    %s13 = smul.addr %s12, 8
    %s14 = scalar_lea.vmem %s0, %s13
    %s15 = sadd.s32 0, 0
    %s16 = smul.u32 2, %s15
  $region5: #{adversarial_loss.1} parent=0 // pred_fallthru
    _
  // Predicated region
  $region6: #{adversarial_loss.1} parent=0 // pred_check
    _
  $region7: #{adversarial_loss.1} parent=0 // pred_check_branch
    %18 = sbr.rel (0) target = $region9
  $region8: #{adversarial_loss.1} parent=0 // pred_region
    %s19 = sadd.s32 0, 0
    %s20 = smul.u32 2, %s19
    %p21 = scmp.lt.s32.totalorder %s20, 1
    %s22 = scalar_select %p21, %s20, 1
    %s23 = smul.addr %s22, 8
    %s24 = scalar_lea.vmem %s1, %s23
    %s25 = sadd.s32 0, 0
    %s26 = smul.u32 2, %s25
  $region9: #{adversarial_loss.1} parent=0 // pred_fallthru
    _
  %s27 = sadd.s32 0, 0
  %s28 = smul.u32 2, %s27
  %p29 = scmp.lt.s32.totalorder %s28, 1
  %s30 = scalar_select %p29, %s28, 1
  %s31 = smul.addr %s30, 8
  %s32 = scalar_lea.vmem %s0, %s31
  %s33 = sadd.s32 0, 0
  %s34 = smul.u32 2, %s33
  %p35 = scmp.lt.s32.totalorder %s34, 1
  %s36 = scalar_select %p35, %s34, 1
  %s37 = smul.addr %s36, 8
  %s38 = scalar_lea.vmem %s1, %s37
  %s39 = sadd.s32 0, 0
  %s40 = smul.u32 2, %s39
  %p41 = scmp.lt.s32.totalorder %s40, 1
  %s42 = scalar_select %p41, %s40, 1
  %s43 = smul.addr %s42, 8
  %s44 = scalar_lea.vmem %s0, %s43
  %s45 = sadd.s32 0, 0
  %s46 = smul.u32 2, %s45
  %s47 = sadd.s32 0, 0
  %s48 = smul.u32 2, %s47
  %p49 = scmp.lt.s32.totalorder %s48, 1
  %s50 = scalar_select %p49, %s48, 1
  %s51 = smul.addr %s50, 8
  %s52 = scalar_lea.vmem %s1, %s51
  %s53 = sadd.s32 0, 0
  %s54 = smul.u32 2, %s53
  %p55 = scmp.eq.s32.totalorder 0, 0
  // Predicated region
  $region10: #{adversarial_loss.1} parent=0 // pred_check
    %p56 = pneg %p55
  $region11: #{adversarial_loss.1} parent=0 // pred_check_branch
    %58 = sbr.rel (%p56) target = $region13
  $region12: #{adversarial_loss.1} parent=0 // pred_region
    %59 = vst [vmem:[%s2] sm:$0xff] 0.0
  $region13: #{adversarial_loss.1} parent=0 // pred_fallthru
    _
  %v60 = vld [vmem:[%s44] sm:$0xff]
  %v61 = vld [vmem:[%s44 + $0x8] sm:$0xff]
  %v62 = vld [vmem:[%s52] sm:$0xff]
  %v63 = vld [vmem:[%s52 + $0x8] sm:$0xff]
  %v64 = vlog2.pop %v60
  %v65 = vmul.f32 %v64, 0.6931472
  %v66 = vlog2.pop %v61
  %v67 = vmul.f32 %v66, 0.6931472
  %v68 = vmax.f32 %v65, -100.0
  %v69 = vmax.f32 %v67, -100.0
  %v70 = vsub.f32 1.0, %v60
  %v71 = vsub.f32 1.0, %v61
  %v72 = vlog2.pop %v70
  %v73 = vmul.f32 %v72, 0.6931472
  %v74 = vlog2.pop %v71
  %v75 = vmul.f32 %v74, 0.6931472
  %v76 = vmax.f32 %v73, -100.0
  %v77 = vmax.f32 %v75, -100.0
  %v78 = vsub.f32 %v68, %v76
  %v79 = vsub.f32 %v69, %v77
  %v80 = vmul.f32 %v62, %v78
  %v81 = vmul.f32 %v63, %v79
  %v82 = vadd.f32 %v76, %v80
  %v83 = vadd.f32 %v77, %v81
  %v84 = vld [vmem:[%s2] sm:$0xff]
  %v85 = vadd.f32 %v82, %v83
  %v86 = vadd.f32 %v84, %v85
  %87 = vst [vmem:[%s2] sm:$0xff] %v86
  // Predicated region
  $region14: #{adversarial_loss.1} parent=0 // pred_check
    _
  $region15: #{adversarial_loss.1} parent=0 // pred_check_branch
    %89 = sbr.rel (0) target = $region17
  $region16: #{adversarial_loss.1} parent=0 // pred_region
    _
  $region17: #{adversarial_loss.1} parent=0 // pred_fallthru
    _
  // Predicated region
  $region18: #{adversarial_loss.1} parent=0 // pred_check
    _
  $region19: #{adversarial_loss.1} parent=0 // pred_check_branch
    %91 = sbr.rel (0) target = $region21
  $region20: #{adversarial_loss.1} parent=0 // pred_region
    _
  $region21: #{adversarial_loss.1} parent=0 // pred_fallthru
    _

</llo_original>
